<compile_context>
chip_gen: v6e
topology: v6e:2x2x1
jax: 0.10.0
libtpu: 0.0.40
codegen_flags: <defaults>
</compile_context>

<pallas_src>
import jax
import jax.numpy as jnp
from jax.experimental import pallas as pl
from jax.experimental.pallas import tpu as pltpu


# ---------------------------------------------------------------------------
# In-kernel helper: assemble the K-concatenated LHS for the 3 H-row taps
# ---------------------------------------------------------------------------
def _band_lhs(z2d_f32, h, k_total):
    """[M, WC] f32 (M = images_per_step*H, each image's rows contiguous)
       -> [M, k_total] bf16 laid out as [ row-1 | row | row+1 | zero K-pad ].
    row+-1 are zeroed at each image's top/bottom edge (padding=1 along H)."""
    m, wc = z2d_f32.shape
    zero_row = jnp.zeros((1, wc), jnp.float32)
    row = jax.lax.broadcasted_iota(jnp.int32, (m, 1), 0) % h
    up = jnp.concatenate([zero_row, z2d_f32[: m - 1]], axis=0)      # input row i-1
    up = jnp.where(row == 0, jnp.zeros_like(up), up)                # image top edge
    dn = jnp.concatenate([z2d_f32[1:], zero_row], axis=0)           # input row i+1
    dn = jnp.where(row == h - 1, jnp.zeros_like(dn), dn)            # image bottom edge
    parts = [up, z2d_f32, dn]
    if k_total > 3 * wc:                                            # pad K to 128x
        parts.append(jnp.zeros((m, k_total - 3 * wc), jnp.float32))
    return jnp.concatenate(parts, axis=1).astype(jnp.bfloat16)


# ---------------------------------------------------------------------------
# Fused kernel: conv1(+BN+ReLU)+residual -> conv2(+BN+ReLU)
# ---------------------------------------------------------------------------
def _block_b_fused_kernel(x_ref, w1_ref, b1_ref, w2_ref, b2_ref, o_ref):
    """Refs:
      x_ref : [B_blk, H, W*Cin]  bf16  NHWC activation, W and C flattened on lanes
      w1_ref: [K, W*Cin]         bf16  K-concatenated banded conv1 weights
      b1_ref: [1, W*Cin]         f32   conv1 folded bias, tiled over W
      w2_ref: [K, W*Cout]        bf16  K-concatenated banded conv2 weights
      b2_ref: [1, W*Cout]        f32   conv2 folded bias, tiled over W
      o_ref : [B_blk, H, W*Cout] bf16  output (lane-dense last dim)
    """
    bblk, h, wcin = x_ref.shape
    wcout = o_ref.shape[2]
    m = bblk * h
    k_total = w1_ref.shape[0]

    # bf16 over HBM; epilogue math (bias, ReLU, residual) in f32.
    x2d = x_ref[...].astype(jnp.float32).reshape(m, wcin)

    # ---- conv1 + folded BN + ReLU, residual added AFTER ReLU ---------------
    lhs1 = _band_lhs(x2d, h, k_total)
    y1 = jnp.maximum(
        jnp.dot(lhs1, w1_ref[...], preferred_element_type=jnp.float32) + b1_ref[...],
        0.0) + x2d

    # ---- conv2 + folded BN + ReLU (y1 rounded to bf16 before the MXU) ------
    y1_rt = y1.astype(jnp.bfloat16).astype(jnp.float32)   # lossless round trip
    lhs2 = _band_lhs(y1_rt, h, k_total)
    out = jnp.maximum(
        jnp.dot(lhs2, w2_ref[...], preferred_element_type=jnp.float32) + b2_ref[...],
        0.0)
    o_ref[...] = out.reshape(bblk, h, wcout).astype(o_ref.dtype)


# ---------------------------------------------------------------------------
# Weight preparation: fold BN, then build the K-concatenated banded matrix
# ---------------------------------------------------------------------------
def _fold_bn(w_pt, b_conv, gamma, beta, mean, var, eps=1e-5):
    """Fold eval-mode BatchNorm into conv weight/bias.
    w_pt: PyTorch layout [Cout, Cin, 3, 3] -> returns HWIO [3, 3, Cin, Cout]."""
    s = gamma / jnp.sqrt(var + eps)                      # [Cout]
    w = jnp.transpose(w_pt, (2, 3, 1, 0)) * s            # [3, 3, Cin, Cout]
    b = (b_conv - mean) * s + beta
    return w, b


def _banded_weights(w_fold, width, k_total, dtype=jnp.bfloat16):
    """[3,3,Cin,Cout] folded conv weights -> [k_total, W*Cout] banded matrix.

    Row block dy (size W*Cin) holds band[dy] with
      band[dy][wi*Cin+ci, wo*Cout+co] = w_fold[dy, wi-wo+1, ci, co] for |wi-wo|<=1
    so that  y[i] = [x[i-1] | x[i] | x[i+1]] @ W  reproduces a 3x3 conv with
    padding=1 along W (H padding handled by zero rows in the kernel LHS)."""
    _, _, cin, cout = w_fold.shape
    wi = jnp.arange(width)[:, None]                      # input column
    wo = jnp.arange(width)[None, :]                      # output column
    dx = wi - wo + 1                                     # W-tap index (0..2 valid)
    valid = ((dx >= 0) & (dx <= 2)).astype(w_fold.dtype)[..., None, None]
    dxc = jnp.clip(dx, 0, 2)
    bands = []
    for dy in range(3):
        tap = w_fold[dy][dxc] * valid                    # [W, W, Cin, Cout]
        bands.append(jnp.transpose(tap, (0, 2, 1, 3))    # [W, Cin, W, Cout]
                     .reshape(width * cin, width * cout))
    w_cat = jnp.concatenate(bands, axis=0)               # [3*W*Cin, W*Cout]
    pad = k_total - w_cat.shape[0]
    if pad:
        w_cat = jnp.concatenate(
            [w_cat, jnp.zeros((pad, width * cout), w_cat.dtype)], axis=0)
    return w_cat.astype(dtype)                           # [k_total, W*Cout]


def make_block_type_b_params(key, in_c, out_c):
    ks = jax.random.split(key, 10)
    p = {}
    # conv1: in_c -> in_c
    w1 = jax.random.normal(ks[0], (in_c, in_c, 3, 3), jnp.float32) * 0.1
    b1 = jax.random.normal(ks[1], (in_c,), jnp.float32) * 0.1
    g1 = 1.0 + 0.1 * jax.random.normal(ks[2], (in_c,), jnp.float32)
    be1 = 0.1 * jax.random.normal(ks[3], (in_c,), jnp.float32)
    m1 = 0.1 * jax.random.normal(ks[4], (in_c,), jnp.float32)
    v1 = jnp.abs(jax.random.normal(ks[5], (in_c,), jnp.float32)) + 0.5
    p["w1"], p["b1"] = _fold_bn(w1, b1, g1, be1, m1, v1)
    # conv2: in_c -> out_c
    w2 = jax.random.normal(ks[6], (out_c, in_c, 3, 3), jnp.float32) * 0.1
    b2 = jax.random.normal(ks[7], (out_c,), jnp.float32) * 0.1
    g2 = 1.0 + 0.1 * jax.random.normal(ks[8], (out_c,), jnp.float32)
    be2 = 0.1 * jax.random.normal(ks[9], (out_c,), jnp.float32)
    m2 = jnp.zeros((out_c,), jnp.float32)
    v2 = jnp.ones((out_c,), jnp.float32)
    p["w2"], p["b2"] = _fold_bn(w2, b2, g2, be2, m2, v2)
    return p


# ---------------------------------------------------------------------------
# Forward pass wrappers
# ---------------------------------------------------------------------------
def block_type_b_nhwc(x_nhwc, params, images_per_step=None):
    """Fused BlockTypeB forward: [N,H,W,Cin] f32 -> [N,H,W,Cout] bf16."""
    n, h, w, cin = x_nhwc.shape
    cout = params["w2"].shape[-1]
    wcin, wcout = w * cin, w * cout
    k_total = ((3 * wcin + 127) // 128) * 128            # K padded to 128 multiple

    if images_per_step is None:
        # grid >= 2 keeps both v7x TensorCores busy; larger M amortizes per-step
        # overhead on the single-core v5e/v6e.
        bblk = n // 2 if (n % 2 == 0 and n >= 2) else 1
        bblk = min(max(bblk, 1), max(1, 512 // h))        # keep per-step tile modest
        while n % bblk:
            bblk -= 1
    else:
        bblk = images_per_step
    assert n % bblk == 0

    x_flat = x_nhwc.reshape(n, h, wcin).astype(jnp.bfloat16)        # bf16 over HBM
    wb1 = _banded_weights(params["w1"], w, k_total)                 # [K, W*Cin]
    wb2 = _banded_weights(params["w2"], w, k_total)                 # [K, W*Cout]
    b1r = jnp.tile(params["b1"], w)[None, :].astype(jnp.float32)    # [1, W*Cin]
    b2r = jnp.tile(params["b2"], w)[None, :].astype(jnp.float32)    # [1, W*Cout]

    flops = 2 * n * h * 3 * wcin * (wcin + wcout)
    bytes_accessed = (x_flat.size * 2 + wb1.size * 2 + wb2.size * 2
                      + (b1r.size + b2r.size) * 4 + n * h * wcout * 2)

    out = pl.pallas_call(
        _block_b_fused_kernel,
        out_shape=jax.ShapeDtypeStruct((n, h, wcout), jnp.bfloat16),
        grid_spec=pltpu.PrefetchScalarGridSpec(
            num_scalar_prefetch=0,
            grid=(n // bblk,),
            in_specs=[
                pl.BlockSpec((bblk, h, wcin), lambda i: (i, 0, 0)),   # activation
                pl.BlockSpec((k_total, wcin), lambda i: (0, 0)),      # conv1 W
                pl.BlockSpec((1, wcin), lambda i: (0, 0)),            # conv1 b
                pl.BlockSpec((k_total, wcout), lambda i: (0, 0)),     # conv2 W
                pl.BlockSpec((1, wcout), lambda i: (0, 0)),           # conv2 b
            ],
            out_specs=pl.BlockSpec((bblk, h, wcout), lambda i: (i, 0, 0)),
        ),
        compiler_params=pltpu.CompilerParams(
            dimension_semantics=("parallel",),
            vmem_limit_bytes=32 * 1024 * 1024),
        cost_estimate=pl.CostEstimate(flops=flops, transcendentals=0,
                                      bytes_accessed=bytes_accessed),
    )(x_flat, wb1, b1r, wb2, b2r)

    return out.reshape(n, h, w, cout)


@jax.jit
def block_type_b(x_nchw, params):
    """PyTorch-layout entry point (NCHW in / NCHW out)."""
    # TODO(synk): keep the surrounding model NHWC end-to-end; these two layout
    # passes over HBM cost more than the fused kernel itself at small shapes.
    x = jnp.transpose(x_nchw, (0, 2, 3, 1))
    y = block_type_b_nhwc(x, params)
    return jnp.transpose(y, (0, 3, 1, 2))


# ---------------------------------------------------------------------------
# Plain-JAX reference (lax.conv), mirroring the kernel's bf16 operand rounding
# ---------------------------------------------------------------------------
def block_type_b_ref(x_nchw, params):
    q = lambda a: a.astype(jnp.bfloat16).astype(jnp.float32)

    def conv_bn_relu(x, w, b):
        y = jax.lax.conv_general_dilated(
            x, w, window_strides=(1, 1), padding=((1, 1), (1, 1)),
            dimension_numbers=("NCHW", "HWIO", "NCHW"))
        return jnp.maximum(y + b[None, :, None, None], 0.0)

    xq = q(x_nchw)
    y1 = conv_bn_relu(xq, q(params["w1"]), params["b1"]) + xq   # residual after ReLU
    return conv_bn_relu(q(y1), q(params["w2"]), params["b2"])


if __name__ == "__main__":
    in_c, out_c = 4, 8
    n, h, w = 2, 16, 16            # W * out_c = 128 -> lane-dense output tiles

    key = jax.random.PRNGKey(0)
    kx, kp = jax.random.split(key)
    x_nchw = jax.random.normal(kx, (n, in_c, h, w), jnp.float32)
    params = make_block_type_b_params(kp, in_c, out_c)

    # NHWC-native path (preferred: no layout passes over HBM around the kernel).
    x_nhwc = jnp.transpose(x_nchw, (0, 2, 3, 1))
    out_nhwc = jax.block_until_ready(jax.jit(block_type_b_nhwc)(x_nhwc, params))
    # PyTorch-layout wrapper for parity with the original module.
    out_nchw = jax.block_until_ready(block_type_b(x_nchw, params))

    ref = block_type_b_ref(x_nchw, params)
    ref_nhwc = jnp.transpose(ref, (0, 2, 3, 1))

    assert out_nhwc.shape == (n, h, w, out_c), out_nhwc.shape
    assert out_nchw.shape == (n, out_c, h, w), out_nchw.shape

    err = float(jnp.max(jnp.abs(out_nhwc.astype(jnp.float32) - ref_nhwc)))
    assert jnp.allclose(out_nhwc.astype(jnp.float32), ref_nhwc,
                        rtol=2e-2, atol=2e-2), err
    assert jnp.allclose(out_nchw.astype(jnp.float32), ref, rtol=2e-2, atol=2e-2)

    print("KERNEL_OK")
</pallas_src>

<mosaic_0001>
module attributes {stable_mosaic.version = 11 : i64} {
  func.func @_block_b_fused_kernel(%arg0: i32, %arg1: memref<1x16x64xbf16, #tpu.memory_space<vmem>>, %arg2: memref<256x64xbf16, #tpu.memory_space<vmem>>, %arg3: memref<1x64xf32, #tpu.memory_space<vmem>>, %arg4: memref<256x128xbf16, #tpu.memory_space<vmem>>, %arg5: memref<1x128xf32, #tpu.memory_space<vmem>>, %arg6: memref<1x16x128xbf16, #tpu.memory_space<vmem>>) attributes {dimension_semantics = [#tpu.dimension_semantics<parallel>], iteration_bounds = array<i64: 2>, scalar_prefetch = 0 : i64, scratch_operands = 0 : i64, tpu.core_type = #tpu.core_type<tc>, window_params = [{transform_indices = @transform_0, window_bounds = array<i64: 1, 16, 64>}, {pipeline_mode = #tpu.pipeline_mode<synchronous>, transform_indices = @transform_1, window_bounds = array<i64: 256, 64>}, {pipeline_mode = #tpu.pipeline_mode<synchronous>, transform_indices = @transform_2, window_bounds = array<i64: 1, 64>}, {pipeline_mode = #tpu.pipeline_mode<synchronous>, transform_indices = @transform_3, window_bounds = array<i64: 256, 128>}, {pipeline_mode = #tpu.pipeline_mode<synchronous>, transform_indices = @transform_4, window_bounds = array<i64: 1, 128>}, {transform_indices = @transform_5, window_bounds = array<i64: 1, 16, 128>}]} {
    %c0 = arith.constant 0 : index
    %c0_0 = arith.constant 0 : index
    %c0_1 = arith.constant 0 : index
    %0 = vector.load %arg1[%c0, %c0_0, %c0_1] : memref<1x16x64xbf16, #tpu.memory_space<vmem>>, vector<1x16x64xbf16>
    %1 = arith.extf %0 : vector<1x16x64xbf16> to vector<1x16x64xf32>
    %2 = vector.shape_cast %1 : vector<1x16x64xf32> to vector<16x64xf32>
    %cst = arith.constant 0.000000e+00 : f32
    %3 = vector.broadcast %cst : f32 to vector<1x64xf32>
    %4 = tpu.iota {dimensions = array<i32: 0>} : vector<16x1xi32>
    %c16_i32 = arith.constant 16 : i32
    %c0_i32 = arith.constant 0 : i32
    %5 = arith.cmpi eq, %c16_i32, %c0_i32 : i32
    %c1_i32 = arith.constant 1 : i32
    %6 = arith.select %5, %c1_i32, %c16_i32 : i32
    %7 = vector.broadcast %6 : i32 to vector<16x1xi32>
    %8 = arith.remsi %4, %7 : vector<16x1xi32>
    %c0_i32_2 = arith.constant 0 : i32
    %9 = vector.broadcast %c0_i32_2 : i32 to vector<16x1xi32>
    %10 = arith.cmpi ne, %8, %9 : vector<16x1xi32>
    %c0_i32_3 = arith.constant 0 : i32
    %11 = vector.broadcast %c0_i32_3 : i32 to vector<16x1xi32>
    %12 = arith.cmpi slt, %8, %11 : vector<16x1xi32>
    %c0_i32_4 = arith.constant 0 : i32
    %13 = arith.cmpi slt, %6, %c0_i32_4 : i32
    %14 = vector.broadcast %13 : i1 to vector<16x1xi1>
    %15 = vector.broadcast %14 : vector<16x1xi1> to vector<16x1xi1>
    %16 = arith.xori %12, %15 : vector<16x1xi1>
    %17 = arith.andi %16, %10 : vector<16x1xi1>
    %18 = vector.broadcast %6 : i32 to vector<16x1xi32>
    %19 = arith.addi %8, %18 : vector<16x1xi32>
    %20 = arith.select %17, %19, %8 : vector<16x1xi1>, vector<16x1xi32>
    %21 = vector.extract_strided_slice %2 {offsets = [0, 0], sizes = [15, 64], strides = [1, 1]} : vector<16x64xf32> to vector<15x64xf32>
    %22 = tpu.concatenate %3, %21 in 0 : vector<1x64xf32>, vector<15x64xf32> -> vector<16x64xf32>
    %c0_i32_5 = arith.constant 0 : i32
    %23 = vector.broadcast %c0_i32_5 : i32 to vector<16x1xi32>
    %24 = arith.cmpi eq, %20, %23 : vector<16x1xi32>
    %cst_6 = arith.constant 0.000000e+00 : f32
    %25 = vector.broadcast %cst_6 : f32 to vector<16x64xf32>
    %26 = vector.shape_cast %24 : vector<16x1xi1> to vector<16x1xi1>
    %27 = vector.broadcast %26 : vector<16x1xi1> to vector<16x64xi1>
    %28 = arith.select %27, %25, %22 : vector<16x64xi1>, vector<16x64xf32>
    %29 = vector.extract_strided_slice %2 {offsets = [1, 0], sizes = [15, 64], strides = [1, 1]} : vector<16x64xf32> to vector<15x64xf32>
    %30 = tpu.concatenate %29, %3 in 0 : vector<15x64xf32>, vector<1x64xf32> -> vector<16x64xf32>
    %c15_i32 = arith.constant 15 : i32
    %31 = vector.broadcast %c15_i32 : i32 to vector<16x1xi32>
    %32 = arith.cmpi eq, %20, %31 : vector<16x1xi32>
    %cst_7 = arith.constant 0.000000e+00 : f32
    %33 = vector.broadcast %cst_7 : f32 to vector<16x64xf32>
    %34 = vector.shape_cast %32 : vector<16x1xi1> to vector<16x1xi1>
    %35 = vector.broadcast %34 : vector<16x1xi1> to vector<16x64xi1>
    %36 = arith.select %35, %33, %30 : vector<16x64xi1>, vector<16x64xf32>
    %cst_8 = arith.constant 0.000000e+00 : f32
    %37 = vector.broadcast %cst_8 : f32 to vector<16x64xf32>
    %38 = tpu.concatenate %28, %2, %36, %37 in 1 : vector<16x64xf32>, vector<16x64xf32>, vector<16x64xf32>, vector<16x64xf32> -> vector<16x256xf32>
    %39 = arith.truncf %38 : vector<16x256xf32> to vector<16x256xbf16>
    %c0_9 = arith.constant 0 : index
    %c0_10 = arith.constant 0 : index
    %40 = vector.load %arg2[%c0_9, %c0_10] : memref<256x64xbf16, #tpu.memory_space<vmem>>, vector<256x64xbf16>
    %cst_11 = arith.constant dense<0.000000e+00> : vector<16x64xf32>
    %41 = tpu.matmul %39, %40, %cst_11 {dimension_numbers = #tpu.dot_dimension_numbers<[1], [0], [0], [1], [0, 0, 1, 1], [], []>} : vector<16x256xbf16>, vector<256x64xbf16>, vector<16x64xf32> -> vector<16x64xf32>
    %c0_12 = arith.constant 0 : index
    %c0_13 = arith.constant 0 : index
    %42 = vector.load %arg3[%c0_12, %c0_13] : memref<1x64xf32, #tpu.memory_space<vmem>>, vector<1x64xf32>
    %43 = vector.broadcast %42 : vector<1x64xf32> to vector<16x64xf32>
    %44 = arith.addf %41, %43 : vector<16x64xf32>
    %cst_14 = arith.constant 0.000000e+00 : f32
    %45 = vector.broadcast %cst_14 : f32 to vector<16x64xf32>
    %46 = arith.maximumf %44, %45 : vector<16x64xf32>
    %47 = arith.addf %46, %2 : vector<16x64xf32>
    %48 = arith.truncf %47 : vector<16x64xf32> to vector<16x64xbf16>
    %49 = arith.extf %48 : vector<16x64xbf16> to vector<16x64xf32>
    %cst_15 = arith.constant 0.000000e+00 : f32
    %50 = vector.broadcast %cst_15 : f32 to vector<1x64xf32>
    %51 = tpu.iota {dimensions = array<i32: 0>} : vector<16x1xi32>
    %c16_i32_16 = arith.constant 16 : i32
    %c0_i32_17 = arith.constant 0 : i32
    %52 = arith.cmpi eq, %c16_i32_16, %c0_i32_17 : i32
    %c1_i32_18 = arith.constant 1 : i32
    %53 = arith.select %52, %c1_i32_18, %c16_i32_16 : i32
    %54 = vector.broadcast %53 : i32 to vector<16x1xi32>
    %55 = arith.remsi %51, %54 : vector<16x1xi32>
    %c0_i32_19 = arith.constant 0 : i32
    %56 = vector.broadcast %c0_i32_19 : i32 to vector<16x1xi32>
    %57 = arith.cmpi ne, %55, %56 : vector<16x1xi32>
    %c0_i32_20 = arith.constant 0 : i32
    %58 = vector.broadcast %c0_i32_20 : i32 to vector<16x1xi32>
    %59 = arith.cmpi slt, %55, %58 : vector<16x1xi32>
    %c0_i32_21 = arith.constant 0 : i32
    %60 = arith.cmpi slt, %53, %c0_i32_21 : i32
    %61 = vector.broadcast %60 : i1 to vector<16x1xi1>
    %62 = vector.broadcast %61 : vector<16x1xi1> to vector<16x1xi1>
    %63 = arith.xori %59, %62 : vector<16x1xi1>
    %64 = arith.andi %63, %57 : vector<16x1xi1>
    %65 = vector.broadcast %53 : i32 to vector<16x1xi32>
    %66 = arith.addi %55, %65 : vector<16x1xi32>
    %67 = arith.select %64, %66, %55 : vector<16x1xi1>, vector<16x1xi32>
    %68 = vector.extract_strided_slice %49 {offsets = [0, 0], sizes = [15, 64], strides = [1, 1]} : vector<16x64xf32> to vector<15x64xf32>
    %69 = tpu.concatenate %50, %68 in 0 : vector<1x64xf32>, vector<15x64xf32> -> vector<16x64xf32>
    %c0_i32_22 = arith.constant 0 : i32
    %70 = vector.broadcast %c0_i32_22 : i32 to vector<16x1xi32>
    %71 = arith.cmpi eq, %67, %70 : vector<16x1xi32>
    %cst_23 = arith.constant 0.000000e+00 : f32
    %72 = vector.broadcast %cst_23 : f32 to vector<16x64xf32>
    %73 = vector.shape_cast %71 : vector<16x1xi1> to vector<16x1xi1>
    %74 = vector.broadcast %73 : vector<16x1xi1> to vector<16x64xi1>
    %75 = arith.select %74, %72, %69 : vector<16x64xi1>, vector<16x64xf32>
    %76 = vector.extract_strided_slice %49 {offsets = [1, 0], sizes = [15, 64], strides = [1, 1]} : vector<16x64xf32> to vector<15x64xf32>
    %77 = tpu.concatenate %76, %50 in 0 : vector<15x64xf32>, vector<1x64xf32> -> vector<16x64xf32>
    %c15_i32_24 = arith.constant 15 : i32
    %78 = vector.broadcast %c15_i32_24 : i32 to vector<16x1xi32>
    %79 = arith.cmpi eq, %67, %78 : vector<16x1xi32>
    %cst_25 = arith.constant 0.000000e+00 : f32
    %80 = vector.broadcast %cst_25 : f32 to vector<16x64xf32>
    %81 = vector.shape_cast %79 : vector<16x1xi1> to vector<16x1xi1>
    %82 = vector.broadcast %81 : vector<16x1xi1> to vector<16x64xi1>
    %83 = arith.select %82, %80, %77 : vector<16x64xi1>, vector<16x64xf32>
    %cst_26 = arith.constant 0.000000e+00 : f32
    %84 = vector.broadcast %cst_26 : f32 to vector<16x64xf32>
    %85 = tpu.concatenate %75, %49, %83, %84 in 1 : vector<16x64xf32>, vector<16x64xf32>, vector<16x64xf32>, vector<16x64xf32> -> vector<16x256xf32>
    %86 = arith.truncf %85 : vector<16x256xf32> to vector<16x256xbf16>
    %c0_27 = arith.constant 0 : index
    %c0_28 = arith.constant 0 : index
    %87 = vector.load %arg4[%c0_27, %c0_28] : memref<256x128xbf16, #tpu.memory_space<vmem>>, vector<256x128xbf16>
    %cst_29 = arith.constant dense<0.000000e+00> : vector<16x128xf32>
    %88 = tpu.matmul %86, %87, %cst_29 {dimension_numbers = #tpu.dot_dimension_numbers<[1], [0], [0], [1], [0, 0, 1, 1], [], []>} : vector<16x256xbf16>, vector<256x128xbf16>, vector<16x128xf32> -> vector<16x128xf32>
    %c0_30 = arith.constant 0 : index
    %c0_31 = arith.constant 0 : index
    %89 = vector.load %arg5[%c0_30, %c0_31] : memref<1x128xf32, #tpu.memory_space<vmem>>, vector<1x128xf32>
    %90 = vector.broadcast %89 : vector<1x128xf32> to vector<16x128xf32>
    %91 = arith.addf %88, %90 : vector<16x128xf32>
    %cst_32 = arith.constant 0.000000e+00 : f32
    %92 = vector.broadcast %cst_32 : f32 to vector<16x128xf32>
    %93 = arith.maximumf %91, %92 : vector<16x128xf32>
    %94 = vector.shape_cast %93 : vector<16x128xf32> to vector<1x16x128xf32>
    %95 = arith.truncf %94 : vector<1x16x128xf32> to vector<1x16x128xbf16>
    %c0_33 = arith.constant 0 : index
    %c0_34 = arith.constant 0 : index
    %c0_35 = arith.constant 0 : index
    %96 = vector.load %arg6[%c0_33, %c0_34, %c0_35] : memref<1x16x128xbf16, #tpu.memory_space<vmem>>, vector<1x16x128xbf16>
    tpu.vector_store %arg6[%c0_33, %c0_34, %c0_35], %95 {strides = array<i32>} : memref<1x16x128xbf16, #tpu.memory_space<vmem>>, vector<1x16x128xbf16>,
    return
  }
  func.func @transform_0(%arg0: i32) -> (i32, i32, i32) {
    %c0_i32 = arith.constant 0 : i32
    %c0_i32_0 = arith.constant 0 : i32
    %c0_i32_1 = arith.constant 0 : i32
    return %arg0, %c0_i32, %c0_i32_0 : i32, i32, i32
  }
  func.func @transform_1(%arg0: i32) -> (i32, i32) {
    %c0_i32 = arith.constant 0 : i32
    %c0_i32_0 = arith.constant 0 : i32
    %c0_i32_1 = arith.constant 0 : i32
    return %c0_i32, %c0_i32_0 : i32, i32
  }
  func.func @transform_2(%arg0: i32) -> (i32, i32) {
    %c0_i32 = arith.constant 0 : i32
    %c0_i32_0 = arith.constant 0 : i32
    %c0_i32_1 = arith.constant 0 : i32
    return %c0_i32, %c0_i32_0 : i32, i32
  }
  func.func @transform_3(%arg0: i32) -> (i32, i32) {
    %c0_i32 = arith.constant 0 : i32
    %c0_i32_0 = arith.constant 0 : i32
    %c0_i32_1 = arith.constant 0 : i32
    return %c0_i32, %c0_i32_0 : i32, i32
  }
  func.func @transform_4(%arg0: i32) -> (i32, i32) {
    %c0_i32 = arith.constant 0 : i32
    %c0_i32_0 = arith.constant 0 : i32
    %c0_i32_1 = arith.constant 0 : i32
    return %c0_i32, %c0_i32_0 : i32, i32
  }
  func.func @transform_5(%arg0: i32) -> (i32, i32, i32) {
    %c0_i32 = arith.constant 0 : i32
    %c0_i32_0 = arith.constant 0 : i32
    %c0_i32_1 = arith.constant 0 : i32
    return %arg0, %c0_i32, %c0_i32_0 : i32, i32, i32
  }
}

</mosaic_0001>

<llo_original>
// kernel: tile.13
$region0: #{tile.13}
  #allocation0 [shape = 's32[1]{0}', space=sflag, size = 0x4, scoped, tag = 'scoped memory for tile.13']
  %s0 = inlined_call_operand.vmem [shape: f32[4], index: 0, kind: input, shape index: {}]
  %s1 = inlined_call_operand.vmem [shape: f32[16,4], index: 1, kind: output, shape index: {}]
  // Predicated region
  $region2: #{tile.13} parent=0 // pred_check
    _
  $region3: #{tile.13} parent=0 // pred_check_branch
    %3 = sbr.rel (0) target = $region5
  $region4: #{tile.13} parent=0 // pred_region
    _
  $region5: #{tile.13} parent=0 // pred_fallthru
    _
  %v4 = vld [vmem:[%s0] ss:$0 sm:$0xff]
  %5 = vst [vmem:[%s1] sm:$0xff] %v4
  %s6 = scalar_lea.vmem %s1, 8
  %7 = vst [vmem:[%s6] sm:$0xff] %v4

// kernel: tile.14
$region0: #{tile.14}
  %s0 = inlined_call_operand.vmem [shape: f32[16,4], index: 0, kind: input, shape index: {}]
  %s1 = inlined_call_operand.vmem [shape: f32[1,64], index: 1, kind: output, shape index: {}]
  $region1: #{tile.14} parent=0
    #allocation0 [shape = 'u8[4096]{0}', space=vmem, size = 0x1000, scoped, tag = 'scoped mem for output reshape']
    %v2 = vld [vmem:[%s0] sm:$0x1]
    %vm3 = vcmask 31744
    %4 = vst.msk [vmem:[#allocation0] sm:$0x1] %vm3, %v2
    %s5 = scalar_lea.vmem %s0, 15
    %v6 = vld [vmem:[%s5] sm:$0x1]
    %7 = vrot.lane.b32.xlu0 %v6, 60
    %v8 = vpop.permute.xlu0 %7
    %vm9 = vcmask 523744
    %10 = vst.msk [vmem:[#allocation0] sm:$0x1] %vm9, %v8
    %s11 = scalar_lea.vmem %s0, 14
    %v12 = vld [vmem:[%s11] sm:$0x1]
    %13 = vrot.lane.b32.xlu0 %v12, 56
    %v14 = vpop.permute.xlu0 %13
    %vm15 = vcmask 490944
    %16 = vst.msk [vmem:[#allocation0] sm:$0x1] %vm15, %v14
    %s17 = scalar_lea.vmem %s0, 13
    %v18 = vld [vmem:[%s17] sm:$0x1]
    %19 = vrot.lane.b32.xlu0 %v18, 52
    %v20 = vpop.permute.xlu0 %19
    %vm21 = vcmask 458144
    %22 = vst.msk [vmem:[#allocation0] sm:$0x1] %vm21, %v20
    %s23 = scalar_lea.vmem %s0, 12
    %v24 = vld [vmem:[%s23] sm:$0x1]
    %25 = vrot.lane.b32.xlu0 %v24, 48
    %v26 = vpop.permute.xlu0 %25
    %vm27 = vcmask 425344
    %28 = vst.msk [vmem:[#allocation0] sm:$0x1] %vm27, %v26
    %s29 = scalar_lea.vmem %s0, 11
    %v30 = vld [vmem:[%s29] sm:$0x1]
    %31 = vrot.lane.b32.xlu0 %v30, 44
    %v32 = vpop.permute.xlu0 %31
    %vm33 = vcmask 392544
    %34 = vst.msk [vmem:[#allocation0] sm:$0x1] %vm33, %v32
    %s35 = scalar_lea.vmem %s0, 10
    %v36 = vld [vmem:[%s35] sm:$0x1]
    %37 = vrot.lane.b32.xlu0 %v36, 40
    %v38 = vpop.permute.xlu0 %37
    %vm39 = vcmask 359744
    %40 = vst.msk [vmem:[#allocation0] sm:$0x1] %vm39, %v38
    %s41 = scalar_lea.vmem %s0, 9
    %v42 = vld [vmem:[%s41] sm:$0x1]
    %43 = vrot.lane.b32.xlu0 %v42, 36
    %v44 = vpop.permute.xlu0 %43
    %vm45 = vcmask 326944
    %46 = vst.msk [vmem:[#allocation0] sm:$0x1] %vm45, %v44
    %s47 = scalar_lea.vmem %s0, 8
    %v48 = vld [vmem:[%s47] sm:$0x1]
    %49 = vrot.lane.b32.xlu0 %v48, 32
    %v50 = vpop.permute.xlu0 %49
    %vm51 = vcmask 294144
    %52 = vst.msk [vmem:[#allocation0] sm:$0x1] %vm51, %v50
    %s53 = scalar_lea.vmem %s0, 7
    %v54 = vld [vmem:[%s53] sm:$0x1]
    %55 = vrot.lane.b32.xlu0 %v54, 28
    %v56 = vpop.permute.xlu0 %55
    %vm57 = vcmask 261344
    %58 = vst.msk [vmem:[#allocation0] sm:$0x1] %vm57, %v56
    %s59 = scalar_lea.vmem %s0, 6
    %v60 = vld [vmem:[%s59] sm:$0x1]
    %61 = vrot.lane.b32.xlu0 %v60, 24
    %v62 = vpop.permute.xlu0 %61
    %vm63 = vcmask 228544
    %64 = vst.msk [vmem:[#allocation0] sm:$0x1] %vm63, %v62
    %s65 = scalar_lea.vmem %s0, 5
    %v66 = vld [vmem:[%s65] sm:$0x1]
    %67 = vrot.lane.b32.xlu0 %v66, 20
    %v68 = vpop.permute.xlu0 %67
    %vm69 = vcmask 195744
    %70 = vst.msk [vmem:[#allocation0] sm:$0x1] %vm69, %v68
    %s71 = scalar_lea.vmem %s0, 4
    %v72 = vld [vmem:[%s71] sm:$0x1]
    %73 = vrot.lane.b32.xlu0 %v72, 16
    %v74 = vpop.permute.xlu0 %73
    %vm75 = vcmask 162944
    %76 = vst.msk [vmem:[#allocation0] sm:$0x1] %vm75, %v74
    %s77 = scalar_lea.vmem %s0, 3
    %v78 = vld [vmem:[%s77] sm:$0x1]
    %79 = vrot.lane.b32.xlu0 %v78, 12
    %v80 = vpop.permute.xlu0 %79
    %vm81 = vcmask 130144
    %82 = vst.msk [vmem:[#allocation0] sm:$0x1] %vm81, %v80
    %s83 = scalar_lea.vmem %s0, 2
    %v84 = vld [vmem:[%s83] sm:$0x1]
    %85 = vrot.lane.b32.xlu0 %v84, 8
    %v86 = vpop.permute.xlu0 %85
    %vm87 = vcmask 97344
    %88 = vst.msk [vmem:[#allocation0] sm:$0x1] %vm87, %v86
    %s89 = scalar_lea.vmem %s0, 1
    %v90 = vld [vmem:[%s89] sm:$0x1]
    %91 = vrot.lane.b32.xlu0 %v90, 4
    %v92 = vpop.permute.xlu0 %91
    %vm93 = vcmask 64544
    %94 = vst.msk [vmem:[#allocation0] sm:$0x1] %vm93, %v92
    %s96 = sshll.u32 1, 1
    %s97 = ssub.s32 %s96, 1
    %v99 = vld [vmem:[#allocation0] sm:%s97]
    %s100 = sshll.u32 1, 1
    %s101 = ssub.s32 %s100, 1
    %102 = vst [vmem:[%s1] sm:%s101] %v99

// kernel: tile.18
$region0: #{tile.18}
  #allocation0 [shape = 's32[1]{0}', space=sflag, size = 0x4, scoped, tag = 'scoped memory for tile.18']
  %s0 = inlined_call_operand.vmem [shape: f32[8], index: 0, kind: input, shape index: {}]
  %s1 = inlined_call_operand.vmem [shape: f32[16,8], index: 1, kind: output, shape index: {}]
  // Predicated region
  $region2: #{tile.18} parent=0 // pred_check
    _
  $region3: #{tile.18} parent=0 // pred_check_branch
    %3 = sbr.rel (0) target = $region5
  $region4: #{tile.18} parent=0 // pred_region
    _
  $region5: #{tile.18} parent=0 // pred_fallthru
    _
  %v4 = vld [vmem:[%s0] ss:$0 sm:$0xff]
  %5 = vst [vmem:[%s1] sm:$0xff] %v4
  %s6 = scalar_lea.vmem %s1, 8
  %7 = vst [vmem:[%s6] sm:$0xff] %v4

// kernel: tile.19
$region0: #{tile.19}
  %s0 = inlined_call_operand.vmem [shape: f32[16,8], index: 0, kind: input, shape index: {}]
  %s1 = inlined_call_operand.vmem [shape: f32[1,128], index: 1, kind: output, shape index: {}]
  $region1: #{tile.19} parent=0
    #allocation0 [shape = 'u8[4096]{0}', space=vmem, size = 0x1000, scoped, tag = 'scoped mem for output reshape']
    %v2 = vld [vmem:[%s0] sm:$0x1]
    %vm3 = vcmask 64512
    %4 = vst.msk [vmem:[#allocation0] sm:$0x1] %vm3, %v2
    %s5 = scalar_lea.vmem %s0, 15
    %v6 = vld [vmem:[%s5] sm:$0x1]
    %7 = vrot.lane.b32.xlu0 %v6, 120
    %v8 = vpop.permute.xlu0 %7
    %vm9 = vcmask 1048512
    %10 = vst.msk [vmem:[#allocation0] sm:$0x1] %vm9, %v8
    %s11 = scalar_lea.vmem %s0, 14
    %v12 = vld [vmem:[%s11] sm:$0x1]
    %13 = vrot.lane.b32.xlu0 %v12, 112
    %v14 = vpop.permute.xlu0 %13
    %vm15 = vcmask 982912
    %16 = vst.msk [vmem:[#allocation0] sm:$0x1] %vm15, %v14
    %s17 = scalar_lea.vmem %s0, 13
    %v18 = vld [vmem:[%s17] sm:$0x1]
    %19 = vrot.lane.b32.xlu0 %v18, 104
    %v20 = vpop.permute.xlu0 %19
    %vm21 = vcmask 917312
    %22 = vst.msk [vmem:[#allocation0] sm:$0x1] %vm21, %v20
    %s23 = scalar_lea.vmem %s0, 12
    %v24 = vld [vmem:[%s23] sm:$0x1]
    %25 = vrot.lane.b32.xlu0 %v24, 96
    %v26 = vpop.permute.xlu0 %25
    %vm27 = vcmask 851712
    %28 = vst.msk [vmem:[#allocation0] sm:$0x1] %vm27, %v26
    %s29 = scalar_lea.vmem %s0, 11
    %v30 = vld [vmem:[%s29] sm:$0x1]
    %31 = vrot.lane.b32.xlu0 %v30, 88
    %v32 = vpop.permute.xlu0 %31
    %vm33 = vcmask 786112
    %34 = vst.msk [vmem:[#allocation0] sm:$0x1] %vm33, %v32
    %s35 = scalar_lea.vmem %s0, 10
    %v36 = vld [vmem:[%s35] sm:$0x1]
    %37 = vrot.lane.b32.xlu0 %v36, 80
    %v38 = vpop.permute.xlu0 %37
    %vm39 = vcmask 720512
    %40 = vst.msk [vmem:[#allocation0] sm:$0x1] %vm39, %v38
    %s41 = scalar_lea.vmem %s0, 9
    %v42 = vld [vmem:[%s41] sm:$0x1]
    %43 = vrot.lane.b32.xlu0 %v42, 72
    %v44 = vpop.permute.xlu0 %43
    %vm45 = vcmask 654912
    %46 = vst.msk [vmem:[#allocation0] sm:$0x1] %vm45, %v44
    %s47 = scalar_lea.vmem %s0, 8
    %v48 = vld [vmem:[%s47] sm:$0x1]
    %49 = vrot.lane.b32.xlu0 %v48, 64
    %v50 = vpop.permute.xlu0 %49
    %vm51 = vcmask 589312
    %52 = vst.msk [vmem:[#allocation0] sm:$0x1] %vm51, %v50
    %s53 = scalar_lea.vmem %s0, 7
    %v54 = vld [vmem:[%s53] sm:$0x1]
    %55 = vrot.lane.b32.xlu0 %v54, 56
    %v56 = vpop.permute.xlu0 %55
    %vm57 = vcmask 523712
    %58 = vst.msk [vmem:[#allocation0] sm:$0x1] %vm57, %v56
    %s59 = scalar_lea.vmem %s0, 6
    %v60 = vld [vmem:[%s59] sm:$0x1]
    %61 = vrot.lane.b32.xlu0 %v60, 48
    %v62 = vpop.permute.xlu0 %61
    %vm63 = vcmask 458112
    %64 = vst.msk [vmem:[#allocation0] sm:$0x1] %vm63, %v62
    %s65 = scalar_lea.vmem %s0, 5
    %v66 = vld [vmem:[%s65] sm:$0x1]
    %67 = vrot.lane.b32.xlu0 %v66, 40
    %v68 = vpop.permute.xlu0 %67
    %vm69 = vcmask 392512
    %70 = vst.msk [vmem:[#allocation0] sm:$0x1] %vm69, %v68
    %s71 = scalar_lea.vmem %s0, 4
    %v72 = vld [vmem:[%s71] sm:$0x1]
    %73 = vrot.lane.b32.xlu0 %v72, 32
    %v74 = vpop.permute.xlu0 %73
    %vm75 = vcmask 326912
    %76 = vst.msk [vmem:[#allocation0] sm:$0x1] %vm75, %v74
    %s77 = scalar_lea.vmem %s0, 3
    %v78 = vld [vmem:[%s77] sm:$0x1]
    %79 = vrot.lane.b32.xlu0 %v78, 24
    %v80 = vpop.permute.xlu0 %79
    %vm81 = vcmask 261312
    %82 = vst.msk [vmem:[#allocation0] sm:$0x1] %vm81, %v80
    %s83 = scalar_lea.vmem %s0, 2
    %v84 = vld [vmem:[%s83] sm:$0x1]
    %85 = vrot.lane.b32.xlu0 %v84, 16
    %v86 = vpop.permute.xlu0 %85
    %vm87 = vcmask 195712
    %88 = vst.msk [vmem:[#allocation0] sm:$0x1] %vm87, %v86
    %s89 = scalar_lea.vmem %s0, 1
    %v90 = vld [vmem:[%s89] sm:$0x1]
    %91 = vrot.lane.b32.xlu0 %v90, 8
    %v92 = vpop.permute.xlu0 %91
    %vm93 = vcmask 130112
    %94 = vst.msk [vmem:[#allocation0] sm:$0x1] %vm93, %v92
    %s96 = sshll.u32 1, 1
    %s97 = ssub.s32 %s96, 1
    %v99 = vld [vmem:[#allocation0] sm:%s97]
    %s100 = sshll.u32 1, 1
    %s101 = ssub.s32 %s100, 1
    %102 = vst [vmem:[%s1] sm:%s101] %v99

// kernel: block_type_b_nhwc.1
$region0: #{block_type_b_nhwc.1}
  #allocation0 [shape = 'u32[]', space=smem, size = 0x4, offset = 0x4, fixed_abs, tag = 'smem constant byte address 0x4 - core index']
  #allocation1 [shape = 'u32[144,128]{1,0:T(1,128)}', space=vmem, size = 0x12000, scoped, tag = 'internal scratch']
  %s0 = inlined_call_operand.vmem [shape: bf16[2,16,64], index: 0, kind: input, shape index: {}]
  %s1 = inlined_call_operand.vmem [shape: bf16[256,64], index: 1, kind: input, shape index: {}]
  %s2 = inlined_call_operand.vmem [shape: f32[1,64], index: 2, kind: input, shape index: {}]
  %s3 = inlined_call_operand.vmem [shape: bf16[256,128], index: 3, kind: input, shape index: {}]
  %s4 = inlined_call_operand.vmem [shape: f32[1,128], index: 4, kind: input, shape index: {}]
  %s5 = inlined_call_operand.vmem [shape: bf16[2,16,128], index: 5, kind: output, shape index: {}]
  %s6 = sld [smem:[#allocation0]]
  $region53: #{block_type_b_nhwc.1} parent=0
    _
  %s8 = ssub.s32 1, %s6
  %s9 = scalar_select 0, %s8, %s6
  loop: start=0, step=1, limit=4
  $region2: #{block_type_b_nhwc.1} parent=0 // loop_pre_header
    _
  $region3: #{block_type_b_nhwc.1} parent=0 // loop_header
    %s11 = sphi 0, %s15
    %p12 = scmp.ge.s32.totalorder %s11, 4
    %s21 = sphi 0, %s23
    %s24 = sphi 0, %s21
    %s25 = sphi 0, %s24
    %s41 = sphi 0, %s25
    %s45 = sphi 0, %s45
    %s47 = sphi 0, %s45
    %s48 = sphi 0, %s47
    %s62 = sphi 0, %s48
    %s66 = sphi 0, %s66
    %s68 = sphi 0, %s66
    %s69 = sphi 0, %s68
    %s83 = sphi 0, %s69
    %s87 = sphi 0, %s87
    %s89 = sphi 0, %s87
    %s90 = sphi 0, %s89
    %s104 = sphi 0, %s90
    %s108 = sphi 0, %s108
    %s110 = sphi 0, %s108
    %s111 = sphi 0, %s110
    %s125 = sphi 0, %s111
    %s131 = sphi 0, %s133
    %s134 = sphi 0, %s131
    %s135 = sphi 0, %s134
    %s151 = sphi 0, %s135
  $region4: #{block_type_b_nhwc.1} parent=0 // loop_header_branch
    %14 = sbr.rel (%p12) target = $region8
  $region5: #{block_type_b_nhwc.1} parent=0 // loop_body
    %s16 = ssub.s32 %s11, 1
    %s17 = ssub.s32 %s11, 2
    %s18 = sadd.s32 %s11, 1
    %s19 = ssub.s32 %s11, %s18
    %p20 = scmp.eq.s32.totalorder %s19, 0
    %s22 = sadd.s32 %s21, 1
    %s23 = scalar_select %p20, %s21, %s22
    %p26 = pneg %p20
    %p27 = scmp.eq.s32.totalorder %s11, 1
    %p28 = por %p26, %p27
    %p29 = scmp.ne.s32.totalorder %s21, %s24
    %p30 = scmp.eq.s32.totalorder %s11, 0
    %p31 = por %p29, %p30
    %p32 = scmp.ne.s32.totalorder %s21, %s24
    %p33 = scmp.eq.s32.totalorder %s16, 1
    %p34 = por %p32, %p33
    %p35 = scmp.ne.s32.totalorder %s24, %s25
    %p36 = scmp.eq.s32.totalorder %s16, 0
    %p37 = por %p35, %p36
    %p38 = scmp.ne.s32.totalorder %s24, %s25
    %p39 = scmp.eq.s32.totalorder %s17, 1
    %p40 = por %p38, %p39
    %p42 = scmp.ne.s32.totalorder %s25, %s41
    %p43 = scmp.eq.s32.totalorder %s17, 0
    %p44 = por %p42, %p43
    %s46 = sadd.s32 %s45, 1
    %p49 = scmp.eq.s32.totalorder %s11, 1
    %p50 = scmp.ne.s32.totalorder %s45, %s47
    %p51 = scmp.eq.s32.totalorder %s11, 0
    %p52 = por %p50, %p51
    %p53 = scmp.ne.s32.totalorder %s45, %s47
    %p54 = scmp.eq.s32.totalorder %s16, 1
    %p55 = por %p53, %p54
    %p56 = scmp.ne.s32.totalorder %s47, %s48
    %p57 = scmp.eq.s32.totalorder %s16, 0
    %p58 = por %p56, %p57
    %p59 = scmp.ne.s32.totalorder %s47, %s48
    %p60 = scmp.eq.s32.totalorder %s17, 1
    %p61 = por %p59, %p60
    %p63 = scmp.ne.s32.totalorder %s48, %s62
    %p64 = scmp.eq.s32.totalorder %s17, 0
    %p65 = por %p63, %p64
    %s67 = sadd.s32 %s66, 1
    %p70 = scmp.eq.s32.totalorder %s11, 1
    %p71 = scmp.ne.s32.totalorder %s66, %s68
    %p72 = scmp.eq.s32.totalorder %s11, 0
    %p73 = por %p71, %p72
    %p74 = scmp.ne.s32.totalorder %s66, %s68
    %p75 = scmp.eq.s32.totalorder %s16, 1
    %p76 = por %p74, %p75
    %p77 = scmp.ne.s32.totalorder %s68, %s69
    %p78 = scmp.eq.s32.totalorder %s16, 0
    %p79 = por %p77, %p78
    %p80 = scmp.ne.s32.totalorder %s68, %s69
    %p81 = scmp.eq.s32.totalorder %s17, 1
    %p82 = por %p80, %p81
    %p84 = scmp.ne.s32.totalorder %s69, %s83
    %p85 = scmp.eq.s32.totalorder %s17, 0
    %p86 = por %p84, %p85
    %s88 = sadd.s32 %s87, 1
    %p91 = scmp.eq.s32.totalorder %s11, 1
    %p92 = scmp.ne.s32.totalorder %s87, %s89
    %p93 = scmp.eq.s32.totalorder %s11, 0
    %p94 = por %p92, %p93
    %p95 = scmp.ne.s32.totalorder %s87, %s89
    %p96 = scmp.eq.s32.totalorder %s16, 1
    %p97 = por %p95, %p96
    %p98 = scmp.ne.s32.totalorder %s89, %s90
    %p99 = scmp.eq.s32.totalorder %s16, 0
    %p100 = por %p98, %p99
    %p101 = scmp.ne.s32.totalorder %s89, %s90
    %p102 = scmp.eq.s32.totalorder %s17, 1
    %p103 = por %p101, %p102
    %p105 = scmp.ne.s32.totalorder %s90, %s104
    %p106 = scmp.eq.s32.totalorder %s17, 0
    %p107 = por %p105, %p106
    %s109 = sadd.s32 %s108, 1
    %p112 = scmp.eq.s32.totalorder %s11, 1
    %p113 = scmp.ne.s32.totalorder %s108, %s110
    %p114 = scmp.eq.s32.totalorder %s11, 0
    %p115 = por %p113, %p114
    %p116 = scmp.ne.s32.totalorder %s108, %s110
    %p117 = scmp.eq.s32.totalorder %s16, 1
    %p118 = por %p116, %p117
    %p119 = scmp.ne.s32.totalorder %s110, %s111
    %p120 = scmp.eq.s32.totalorder %s16, 0
    %p121 = por %p119, %p120
    %p122 = scmp.ne.s32.totalorder %s110, %s111
    %p123 = scmp.eq.s32.totalorder %s17, 1
    %p124 = por %p122, %p123
    %p126 = scmp.ne.s32.totalorder %s111, %s125
    %p127 = scmp.eq.s32.totalorder %s17, 0
    %p128 = por %p126, %p127
    %s129 = ssub.s32 %s11, %s18
    %p130 = scmp.eq.s32.totalorder %s129, 0
    %s132 = sadd.s32 %s131, 1
    %s133 = scalar_select %p130, %s131, %s132
    %p136 = pneg %p130
    %p137 = scmp.eq.s32.totalorder %s11, 1
    %p138 = por %p136, %p137
    %p139 = scmp.ne.s32.totalorder %s131, %s134
    %p140 = scmp.eq.s32.totalorder %s11, 0
    %p141 = por %p139, %p140
    %p142 = scmp.ne.s32.totalorder %s131, %s134
    %p143 = scmp.eq.s32.totalorder %s16, 1
    %p144 = por %p142, %p143
    %p145 = scmp.ne.s32.totalorder %s134, %s135
    %p146 = scmp.eq.s32.totalorder %s16, 0
    %p147 = por %p145, %p146
    %p148 = scmp.ne.s32.totalorder %s134, %s135
    %p149 = scmp.eq.s32.totalorder %s17, 1
    %p150 = por %p148, %p149
    %p152 = scmp.ne.s32.totalorder %s135, %s151
    %p153 = scmp.eq.s32.totalorder %s17, 0
    %p154 = por %p152, %p153
    %p155 = scmp.le.s32.totalorder 1, %s11
    %p156 = scmp.lt.s32.totalorder %s11, 3
    %p157 = pnand %p155, %p156
    %p158 = pneg %p157
    // Predicated region
    $region9: #{block_type_b_nhwc.1} parent=5 // pred_check
      _
    $region10: #{block_type_b_nhwc.1} parent=5 // pred_check_branch
      %160 = sbr.rel (%p157) target = $region12
    $region11: #{block_type_b_nhwc.1} parent=5 // pred_region
      %s161 = ssub.s32 %s11, 1
      // Predicated region
      $region13: #{block_type_b_nhwc.1} parent=11 // pred_check
        %p162 = pneg %p58
      $region14: #{block_type_b_nhwc.1} parent=11 // pred_check_branch
        %164 = sbr.rel (%p162) target = $region16
      $region15: #{block_type_b_nhwc.1} parent=11 // pred_region
        _
      $region16: #{block_type_b_nhwc.1} parent=11 // pred_fallthru
        _
      // Predicated region
      $region17: #{block_type_b_nhwc.1} parent=11 // pred_check
        %p165 = pneg %p79
      $region18: #{block_type_b_nhwc.1} parent=11 // pred_check_branch
        %167 = sbr.rel (%p165) target = $region20
      $region19: #{block_type_b_nhwc.1} parent=11 // pred_region
        _
      $region20: #{block_type_b_nhwc.1} parent=11 // pred_fallthru
        _
      // Predicated region
      $region21: #{block_type_b_nhwc.1} parent=11 // pred_check
        %p168 = pneg %p100
      $region22: #{block_type_b_nhwc.1} parent=11 // pred_check_branch
        %170 = sbr.rel (%p168) target = $region24
      $region23: #{block_type_b_nhwc.1} parent=11 // pred_region
        _
      $region24: #{block_type_b_nhwc.1} parent=11 // pred_fallthru
        _
      // Predicated region
      $region25: #{block_type_b_nhwc.1} parent=11 // pred_check
        %p171 = pneg %p121
      $region26: #{block_type_b_nhwc.1} parent=11 // pred_check_branch
        %173 = sbr.rel (%p171) target = $region28
      $region27: #{block_type_b_nhwc.1} parent=11 // pred_region
        _
      $region28: #{block_type_b_nhwc.1} parent=11 // pred_fallthru
        _
    $region12: #{block_type_b_nhwc.1} parent=5 // pred_fallthru
      _
    %p174 = scmp.lt.s32.totalorder %s11, 2
    // Predicated region
    $region29: #{block_type_b_nhwc.1} parent=5 // pred_check
      %p175 = pneg %p174
    $region30: #{block_type_b_nhwc.1} parent=5 // pred_check_branch
      %177 = sbr.rel (%p175) target = $region32
    $region31: #{block_type_b_nhwc.1} parent=5 // pred_region
      // Predicated region
      $region33: #{block_type_b_nhwc.1} parent=31 // pred_check
        %p178 = pneg %p31
      $region34: #{block_type_b_nhwc.1} parent=31 // pred_check_branch
        %180 = sbr.rel (%p178) target = $region36
      $region35: #{block_type_b_nhwc.1} parent=31 // pred_region
        %p181 = scmp.lt.s32.totalorder %s11, 1
        %s182 = scalar_select %p181, %s11, 1
        %s183 = smul.addr %s182, 2
        %s184 = smul.addr %s183, 4
        %s185 = scalar_lea.vmem %s0, %s184
      $region36: #{block_type_b_nhwc.1} parent=31 // pred_fallthru
        _
    $region32: #{block_type_b_nhwc.1} parent=5 // pred_fallthru
      _
    %p186 = scmp.le.s32.totalorder 1, %s11
    %p187 = scmp.lt.s32.totalorder %s11, 3
    %p188 = pnand %p186, %p187
    %p189 = pneg %p188
    // Predicated region
    $region37: #{block_type_b_nhwc.1} parent=5 // pred_check
      _
    $region38: #{block_type_b_nhwc.1} parent=5 // pred_check_branch
      %191 = sbr.rel (%p188) target = $region40
    $region39: #{block_type_b_nhwc.1} parent=5 // pred_region
      %s192 = ssub.s32 %s11, 1
      %p193 = scmp.lt.s32.totalorder %s16, 1
      %s194 = scalar_select %p193, %s16, 1
      %s195 = smul.addr %s194, 2
      %s196 = smul.addr %s195, 4
      %s197 = scalar_lea.vmem %s0, %s196
      %p198 = pneg %p37
      %p199 = pneg %p34
      %p200 = pneg %p58
      %p201 = pneg %p55
      %p202 = pneg %p79
      %p203 = pneg %p76
      %p204 = pneg %p100
      %p205 = pneg %p97
      %p206 = pneg %p121
      %p207 = pneg %p118
      %p208 = pneg %p147
      %p209 = pneg %p144
      %p210 = scmp.lt.s32.totalorder %s16, 1
      %s211 = scalar_select %p210, %s16, 1
      %s212 = smul.addr %s211, 2
      %s213 = smul.addr %s212, 4
      %s214 = scalar_lea.vmem %s5, %s213
      %p215 = scmp.lt.s32.totalorder %s16, 1
      %s216 = scalar_select %p215, %s16, 1
      %s217 = smul.addr %s216, 2
      %s218 = smul.addr %s217, 4
      %s219 = scalar_lea.vmem %s0, %s218
      %p220 = scmp.lt.s32.totalorder %s16, 1
      %s221 = scalar_select %p220, %s16, 1
      %s222 = smul.addr %s221, 2
      %s223 = smul.addr %s222, 4
      %s224 = scalar_lea.vmem %s5, %s223
      %v226 = vld [vmem:[%s219] sm:$0xf]
      %v227 = vld [vmem:[%s219 + $0x4] sm:$0xf]
      %v228 = vunpack.c.l.bf16 %v226
      %v229 = vunpack.c.l.bf16 %v227
      %v230 = vlaneseq
      %v231 = vshrl.u32 %v230, 7
      %v232 = vadd.s32 %v231, 8
      %vm233 = vcmp.lt.s32.totalorder %v231, 0
      %v234 = vsub.s32 0, %v231
      %v235 = vsel %vm233, %v234, %v231
      %v236 = vshrl.u32 %v235, 4
      %v237 = vand.u32 %v235, 15
      %v238 = vsub.s32 0, %v237
      %v239 = vsel %vm233, %v238, %v237
      %vm240 = vcmp.lt.s32.totalorder %v232, 0
      %v241 = vsub.s32 0, %v232
      %v242 = vsel %vm240, %v241, %v232
      %v243 = vshrl.u32 %v242, 4
      %v244 = vand.u32 %v242, 15
      %v245 = vsub.s32 0, %v244
      %v246 = vsel %vm240, %v245, %v244
      %vm247 = vcmp.ne.s32.totalorder %v239, 0
      %vm248 = vcmp.ne.s32.totalorder %v246, 0
      %vm249 = vcmp.lt.s32.totalorder %v239, 0
      %vm250 = vcmp.lt.s32.totalorder %v246, 0
      %vm251 = vmand %vm249, %vm247
      %vm252 = vmand %vm250, %vm248
      %v253 = vadd.s32 %v239, 16
      %v254 = vadd.s32 %v246, 16
      %v255 = vsel %vm251, %v253, %v239
      %v256 = vsel %vm252, %v254, %v246
      %vm259 = vcmask 1040384
      %v260 = vrot.slane %v228, 7
      %v261 = vrot.slane %v229, 7
      %v262 = vsel %vm259, %v260, %v261
      %v265 = vsel %vm259, 0.0, %v260
      %vm266 = vcmp.eq.s32.totalorder %v255, 0
      %vm267 = vcmp.eq.s32.totalorder %v256, 0
      %v268 = vsel %vm266, 1, 0
      %v269 = vsel %vm267, 1, 0
      %vm270 = vcmp.eq.s32.totalorder %v268, 1
      %vm271 = vcmp.eq.s32.totalorder %v269, 1
      %v272 = vsel %vm270, 0.0, %v265
      %v273 = vsel %vm271, 0.0, %v262
      %vm274 = vcmask 1046528
      %v275 = vrot.slane %v228, 1
      %v276 = vrot.slane %v229, 1
      %v277 = vsel %vm274, %v275, %v276
      %v280 = vsel %vm274, %v276, 0.0
      %vm281 = vcmp.eq.s32.totalorder %v255, 15
      %vm282 = vcmp.eq.s32.totalorder %v256, 15
      %v283 = vsel %vm281, 1, 0
      %v284 = vsel %vm282, 1, 0
      %vm285 = vcmp.eq.s32.totalorder %v283, 1
      %vm286 = vcmp.eq.s32.totalorder %v284, 1
      %v287 = vsel %vm285, 0.0, %v277
      %v288 = vsel %vm286, 0.0, %v280
      %289 = vrot.lane.b32.xlu0 %v228, 64
      %v290 = vpop.permute.xlu0 %289
      %291 = vrot.lane.b32.xlu0 %v229, 64
      %v292 = vpop.permute.xlu0 %291
      %vm295 = vcmask 523264
      %v296 = vsel %vm295, %v272, %v290
      %v297 = vsel %vm295, %v273, %v292
      %v298 = vsel %vm295, %v287, 0.0
      %v299 = vsel %vm295, %v288, 0.0
      %v300 = vpack.c.bf16 %v297, %v296
      %v301 = vpack.c.bf16 %v299, %v298
      %v302 = vld [vmem:[%s1] sm:$0xf]
      %v303 = vld [vmem:[%s1 + $0x4] sm:$0xf]
      %v304 = vld [vmem:[%s1 + $0x8] sm:$0xf]
      %v305 = vld [vmem:[%s1 + $0xc] sm:$0xf]
      %v306 = vld [vmem:[%s1 + $0x10] sm:$0xf]
      %v307 = vld [vmem:[%s1 + $0x14] sm:$0xf]
      %v308 = vld [vmem:[%s1 + $0x18] sm:$0xf]
      %v309 = vld [vmem:[%s1 + $0x1c] sm:$0xf]
      %v310 = vld [vmem:[%s1 + $0x20] sm:$0xf]
      %v311 = vld [vmem:[%s1 + $0x24] sm:$0xf]
      %v312 = vld [vmem:[%s1 + $0x28] sm:$0xf]
      %v313 = vld [vmem:[%s1 + $0x2c] sm:$0xf]
      %v314 = vld [vmem:[%s1 + $0x30] sm:$0xf]
      %v315 = vld [vmem:[%s1 + $0x34] sm:$0xf]
      %v316 = vld [vmem:[%s1 + $0x38] sm:$0xf]
      %v317 = vld [vmem:[%s1 + $0x3c] sm:$0xf]
      %v318 = vld [vmem:[%s1 + $0x40] sm:$0xf]
      %v319 = vld [vmem:[%s1 + $0x44] sm:$0xf]
      %v320 = vld [vmem:[%s1 + $0x48] sm:$0xf]
      %v321 = vld [vmem:[%s1 + $0x4c] sm:$0xf]
      %v322 = vld [vmem:[%s1 + $0x50] sm:$0xf]
      %v323 = vld [vmem:[%s1 + $0x54] sm:$0xf]
      %v324 = vld [vmem:[%s1 + $0x58] sm:$0xf]
      %v325 = vld [vmem:[%s1 + $0x5c] sm:$0xf]
      %v326 = vld [vmem:[%s1 + $0x60] sm:$0xf]
      %v327 = vld [vmem:[%s1 + $0x64] sm:$0xf]
      %v328 = vld [vmem:[%s1 + $0x68] sm:$0xf]
      %v329 = vld [vmem:[%s1 + $0x6c] sm:$0xf]
      %v330 = vld [vmem:[%s1 + $0x70] sm:$0xf]
      %v331 = vld [vmem:[%s1 + $0x74] sm:$0xf]
      %v332 = vld [vmem:[%s1 + $0x78] sm:$0xf]
      %v333 = vld [vmem:[%s1 + $0x7c] sm:$0xf]
      %v334 = vld [vmem:[%s2] sm:$0x1]
      %v336 = vlaneseq
      %v337 = vshrl.u32 %v336, 7
      %v338 = vsub.s32 0, %v337
      %v339 = vrot.slane %v334, %v338
      %v373 = vunpack.c.l.b16 %v302
      %v374 = vunpack.c.l.b16 %v303
      %v375 = vunpack.c.l.b16 %v304
      %v376 = vunpack.c.l.b16 %v305
      %v377 = vunpack.c.l.b16 %v306
      %v378 = vunpack.c.l.b16 %v307
      %v379 = vunpack.c.l.b16 %v308
      %v380 = vunpack.c.l.b16 %v309
      %v381 = vunpack.c.l.b16 %v310
      %v382 = vunpack.c.l.b16 %v311
      %v383 = vunpack.c.l.b16 %v312
      %v384 = vunpack.c.l.b16 %v313
      %v385 = vunpack.c.l.b16 %v314
      %v386 = vunpack.c.l.b16 %v315
      %v387 = vunpack.c.l.b16 %v316
      %v388 = vunpack.c.l.b16 %v317
      %v389 = vunpack.c.l.b16 %v318
      %v390 = vunpack.c.l.b16 %v319
      %v391 = vunpack.c.l.b16 %v320
      %v392 = vunpack.c.l.b16 %v321
      %v393 = vunpack.c.l.b16 %v322
      %v394 = vunpack.c.l.b16 %v323
      %v395 = vunpack.c.l.b16 %v324
      %v396 = vunpack.c.l.b16 %v325
      %v397 = vunpack.c.l.b16 %v326
      %v398 = vunpack.c.l.b16 %v327
      %v399 = vunpack.c.l.b16 %v328
      %v400 = vunpack.c.l.b16 %v329
      %v401 = vunpack.c.l.b16 %v330
      %v402 = vunpack.c.l.b16 %v331
      %v403 = vunpack.c.l.b16 %v332
      %v404 = vunpack.c.l.b16 %v333
      %v405 = vpack.c.b16 %v374, %v373
      %v406 = vpack.c.b16 %v376, %v375
      %v407 = vpack.c.b16 %v378, %v377
      %v408 = vpack.c.b16 %v380, %v379
      %v409 = vpack.c.b16 %v382, %v381
      %v410 = vpack.c.b16 %v384, %v383
      %v411 = vpack.c.b16 %v386, %v385
      %v412 = vpack.c.b16 %v388, %v387
      %v413 = vpack.c.b16 %v390, %v389
      %v414 = vpack.c.b16 %v392, %v391
      %v415 = vpack.c.b16 %v394, %v393
      %v416 = vpack.c.b16 %v396, %v395
      %v417 = vpack.c.b16 %v398, %v397
      %v418 = vpack.c.b16 %v400, %v399
      %v419 = vpack.c.b16 %v402, %v401
      %v420 = vpack.c.b16 %v404, %v403
      %437 = vmatprep.subr.bf16.mxu0 0
      %438 = vmatpush1.bf16.msra.mxu0 %v412
      %439 = vmatprep.subr.bf16.mxu0 0
      %440 = vmatpush1.bf16.msra.mxu0 %v411
      %441 = vmatprep.subr.bf16.mxu0 0
      %442 = vmatpush1.bf16.msra.mxu0 %v410
      %443 = vmatprep.subr.bf16.mxu0 0
      %444 = vmatpush1.bf16.msra.mxu0 %v409
      %445 = vmatprep.subr.bf16.mxu0 0
      %446 = vmatpush1.bf16.msra.mxu0 %v408
      %447 = vmatprep.subr.bf16.mxu0 0
      %448 = vmatpush1.bf16.msra.mxu0 %v407
      %449 = vmatprep.subr.bf16.mxu0 0
      %450 = vmatpush1.bf16.msra.mxu0 %v406
      %451 = vmatprep.subr.bf16.mxu0 0
      %452 = vmatpush1.bf16.msra.mxu0 %v405
      %453 = vmatprep.subr.bf16.mxu0 0
      %454 = vmatpush2.bf16.msra.mxu0 %v420
      %455 = vmatprep.subr.bf16.mxu0 0
      %456 = vmatpush2.bf16.msra.mxu0 %v419
      %457 = vmatprep.subr.bf16.mxu0 0
      %458 = vmatpush2.bf16.msra.mxu0 %v418
      %459 = vmatprep.subr.bf16.mxu0 0
      %460 = vmatpush2.bf16.msra.mxu0 %v417
      %461 = vmatprep.subr.bf16.mxu0 0
      %462 = vmatpush2.bf16.msra.mxu0 %v416
      %463 = vmatprep.subr.bf16.mxu0 0
      %464 = vmatpush2.bf16.msra.mxu0 %v415
      %465 = vmatprep.subr.bf16.mxu0 0
      %466 = vmatpush2.bf16.msra.mxu0 %v414
      %467 = vmatprep.subr.bf16.mxu0 0
      %468 = vmatpush2.bf16.msra.mxu0 %v413
      %469 = vmatprep.mubr.bf16.mxu0 %v301
      %470 = vmatmul.mubr.bf16.gmra.mxu0 %v300
      %v471 = vpop.f32.mrf.mxu0
      %v472 = vadd.f32 %v339, %v471
      %v473 = vpop.f32.mrf.mxu0
      %v474 = vpop.f32.mrf.mxu0
      %v475 = vadd.f32 %v339, %v474
      %v476 = vpop.f32.mrf.mxu0
      %477 = vdwg.mxu0
      %v478 = vmax.f32 %v472, 0.0
      %v479 = vmax.f32 %v475, 0.0
      %v480 = vadd.f32 %v478, %v228
      %v481 = vadd.f32 %v479, %v229
      %v482 = vpack.c.bf16 %v481, %v480
      %v483 = vunpack.c.l.bf16 %v482
      %v484 = vunpack.c.h.bf16 %v482
      %v487 = vrot.slane %v483, 7
      %v488 = vrot.slane %v484, 7
      %v489 = vsel %vm259, %v487, %v488
      %v492 = vsel %vm259, 0.0, %v487
      %v493 = vsel %vm270, 0.0, %v492
      %v494 = vsel %vm271, 0.0, %v489
      %v495 = vrot.slane %v483, 1
      %v496 = vrot.slane %v484, 1
      %v497 = vsel %vm274, %v495, %v496
      %v500 = vsel %vm274, %v496, 0.0
      %v501 = vsel %vm285, 0.0, %v497
      %v502 = vsel %vm286, 0.0, %v500
      %503 = vrot.lane.b32.xlu0 %v483, 64
      %v504 = vpop.permute.xlu0 %503
      %505 = vrot.lane.b32.xlu0 %v484, 64
      %v506 = vpop.permute.xlu0 %505
      %v509 = vsel %vm295, %v493, %v504
      %v510 = vsel %vm295, %v494, %v506
      %v511 = vsel %vm295, %v501, 0.0
      %v512 = vsel %vm295, %v502, 0.0
      %v513 = vpack.c.bf16 %v510, %v509
      %v514 = vpack.c.bf16 %v512, %v511
      %v515 = vld [vmem:[%s3] sm:$0xf]
      %v516 = vld [vmem:[%s3 + $0x4] sm:$0xf]
      %v517 = vld [vmem:[%s3 + $0x8] sm:$0xf]
      %v518 = vld [vmem:[%s3 + $0xc] sm:$0xf]
      %v519 = vld [vmem:[%s3 + $0x10] sm:$0xf]
      %v520 = vld [vmem:[%s3 + $0x14] sm:$0xf]
      %v521 = vld [vmem:[%s3 + $0x18] sm:$0xf]
      %v522 = vld [vmem:[%s3 + $0x1c] sm:$0xf]
      %v523 = vld [vmem:[%s3 + $0x20] sm:$0xf]
      %v524 = vld [vmem:[%s3 + $0x24] sm:$0xf]
      %v525 = vld [vmem:[%s3 + $0x28] sm:$0xf]
      %v526 = vld [vmem:[%s3 + $0x2c] sm:$0xf]
      %v527 = vld [vmem:[%s3 + $0x30] sm:$0xf]
      %v528 = vld [vmem:[%s3 + $0x34] sm:$0xf]
      %v529 = vld [vmem:[%s3 + $0x38] sm:$0xf]
      %v530 = vld [vmem:[%s3 + $0x3c] sm:$0xf]
      %v531 = vld [vmem:[%s3 + $0x40] sm:$0xf]
      %v532 = vld [vmem:[%s3 + $0x44] sm:$0xf]
      %v533 = vld [vmem:[%s3 + $0x48] sm:$0xf]
      %v534 = vld [vmem:[%s3 + $0x4c] sm:$0xf]
      %v535 = vld [vmem:[%s3 + $0x50] sm:$0xf]
      %v536 = vld [vmem:[%s3 + $0x54] sm:$0xf]
      %v537 = vld [vmem:[%s3 + $0x58] sm:$0xf]
      %v538 = vld [vmem:[%s3 + $0x5c] sm:$0xf]
      %v539 = vld [vmem:[%s3 + $0x60] sm:$0xf]
      %v540 = vld [vmem:[%s3 + $0x64] sm:$0xf]
      %v541 = vld [vmem:[%s3 + $0x68] sm:$0xf]
      %v542 = vld [vmem:[%s3 + $0x6c] sm:$0xf]
      %v543 = vld [vmem:[%s3 + $0x70] sm:$0xf]
      %v544 = vld [vmem:[%s3 + $0x74] sm:$0xf]
      %v545 = vld [vmem:[%s3 + $0x78] sm:$0xf]
      %v546 = vld [vmem:[%s3 + $0x7c] sm:$0xf]
      %v547 = vld [vmem:[%s4] sm:$0x1]
      %v549 = vlaneseq
      %v550 = vshrl.u32 %v549, 7
      %v551 = vsub.s32 0, %v550
      %v552 = vrot.slane %v547, %v551
      %v586 = vunpack.c.l.b16 %v515
      %v587 = vunpack.c.l.b16 %v516
      %v588 = vunpack.c.l.b16 %v517
      %v589 = vunpack.c.l.b16 %v518
      %v590 = vunpack.c.l.b16 %v519
      %v591 = vunpack.c.l.b16 %v520
      %v592 = vunpack.c.l.b16 %v521
      %v593 = vunpack.c.l.b16 %v522
      %v594 = vunpack.c.l.b16 %v523
      %v595 = vunpack.c.l.b16 %v524
      %v596 = vunpack.c.l.b16 %v525
      %v597 = vunpack.c.l.b16 %v526
      %v598 = vunpack.c.l.b16 %v527
      %v599 = vunpack.c.l.b16 %v528
      %v600 = vunpack.c.l.b16 %v529
      %v601 = vunpack.c.l.b16 %v530
      %v602 = vunpack.c.l.b16 %v531
      %v603 = vunpack.c.l.b16 %v532
      %v604 = vunpack.c.l.b16 %v533
      %v605 = vunpack.c.l.b16 %v534
      %v606 = vunpack.c.l.b16 %v535
      %v607 = vunpack.c.l.b16 %v536
      %v608 = vunpack.c.l.b16 %v537
      %v609 = vunpack.c.l.b16 %v538
      %v610 = vunpack.c.l.b16 %v539
      %v611 = vunpack.c.l.b16 %v540
      %v612 = vunpack.c.l.b16 %v541
      %v613 = vunpack.c.l.b16 %v542
      %v614 = vunpack.c.l.b16 %v543
      %v615 = vunpack.c.l.b16 %v544
      %v616 = vunpack.c.l.b16 %v545
      %v617 = vunpack.c.l.b16 %v546
      %v618 = vpack.c.b16 %v587, %v586
      %v619 = vpack.c.b16 %v589, %v588
      %v620 = vpack.c.b16 %v591, %v590
      %v621 = vpack.c.b16 %v593, %v592
      %v622 = vpack.c.b16 %v595, %v594
      %v623 = vpack.c.b16 %v597, %v596
      %v624 = vpack.c.b16 %v599, %v598
      %v625 = vpack.c.b16 %v601, %v600
      %v626 = vpack.c.b16 %v603, %v602
      %v627 = vpack.c.b16 %v605, %v604
      %v628 = vpack.c.b16 %v607, %v606
      %v629 = vpack.c.b16 %v609, %v608
      %v630 = vpack.c.b16 %v611, %v610
      %v631 = vpack.c.b16 %v613, %v612
      %v632 = vpack.c.b16 %v615, %v614
      %v633 = vpack.c.b16 %v617, %v616
      %650 = vmatprep.subr.bf16.mxu0 0
      %651 = vmatpush1.bf16.msra.mxu0 %v625
      %652 = vmatprep.subr.bf16.mxu0 0
      %653 = vmatpush1.bf16.msra.mxu0 %v624
      %654 = vmatprep.subr.bf16.mxu0 0
      %655 = vmatpush1.bf16.msra.mxu0 %v623
      %656 = vmatprep.subr.bf16.mxu0 0
      %657 = vmatpush1.bf16.msra.mxu0 %v622
      %658 = vmatprep.subr.bf16.mxu0 0
      %659 = vmatpush1.bf16.msra.mxu0 %v621
      %660 = vmatprep.subr.bf16.mxu0 0
      %661 = vmatpush1.bf16.msra.mxu0 %v620
      %662 = vmatprep.subr.bf16.mxu0 0
      %663 = vmatpush1.bf16.msra.mxu0 %v619
      %664 = vmatprep.subr.bf16.mxu0 0
      %665 = vmatpush1.bf16.msra.mxu0 %v618
      %666 = vmatprep.subr.bf16.mxu0 0
      %667 = vmatpush2.bf16.msra.mxu0 %v633
      %668 = vmatprep.subr.bf16.mxu0 0
      %669 = vmatpush2.bf16.msra.mxu0 %v632
      %670 = vmatprep.subr.bf16.mxu0 0
      %671 = vmatpush2.bf16.msra.mxu0 %v631
      %672 = vmatprep.subr.bf16.mxu0 0
      %673 = vmatpush2.bf16.msra.mxu0 %v630
      %674 = vmatprep.subr.bf16.mxu0 0
      %675 = vmatpush2.bf16.msra.mxu0 %v629
      %676 = vmatprep.subr.bf16.mxu0 0
      %677 = vmatpush2.bf16.msra.mxu0 %v628
      %678 = vmatprep.subr.bf16.mxu0 0
      %679 = vmatpush2.bf16.msra.mxu0 %v627
      %680 = vmatprep.subr.bf16.mxu0 0
      %681 = vmatpush2.bf16.msra.mxu0 %v626
      %682 = vmatprep.mubr.bf16.mxu0 %v514
      %683 = vmatmul.mubr.bf16.gmra.mxu0 %v513
      %v684 = vpop.f32.mrf.mxu0
      %v685 = vadd.f32 %v552, %v684
      %v686 = vpop.f32.mrf.mxu0
      %v687 = vpop.f32.mrf.mxu0
      %v688 = vadd.f32 %v552, %v687
      %v689 = vpop.f32.mrf.mxu0
      %690 = vdwg.mxu0
      %v691 = vmax.f32 %v685, 0.0
      %v692 = vmax.f32 %v688, 0.0
      %v693 = vpack.c.bf16 %v692, %v691
      %v695 = vunpack.c.l.b16 %v693
      %v696 = vunpack.c.h.b16 %v693
      %v697 = vpack.c.b16 %v695, %v695
      %v698 = vpack.c.b16 %v696, %v696
      %701 = vst [vmem:[%s224] sm:$0xf] %v697
      %702 = vst [vmem:[%s224 + $0x4] sm:$0xf] %v698
      %p703 = scmp.lt.s32.totalorder %s16, 1
      %s704 = scalar_select %p703, %s16, 1
      %s705 = smul.addr %s704, 2
      %s706 = smul.addr %s705, 4
      %s707 = scalar_lea.vmem %s5, %s706
      // Predicated region
      $region41: #{block_type_b_nhwc.1} parent=39 // pred_check
        %p708 = pneg %p144
      $region42: #{block_type_b_nhwc.1} parent=39 // pred_check_branch
        %710 = sbr.rel (%p708) target = $region44
      $region43: #{block_type_b_nhwc.1} parent=39 // pred_region
        _
      $region44: #{block_type_b_nhwc.1} parent=39 // pred_fallthru
        _
    $region40: #{block_type_b_nhwc.1} parent=5 // pred_fallthru
      _
    %p711 = scmp.le.s32.totalorder 2, %s11
    // Predicated region
    $region45: #{block_type_b_nhwc.1} parent=5 // pred_check
      %p712 = pneg %p711
    $region46: #{block_type_b_nhwc.1} parent=5 // pred_check_branch
      %714 = sbr.rel (%p712) target = $region48
    $region47: #{block_type_b_nhwc.1} parent=5 // pred_region
      %s715 = ssub.s32 %s11, 2
      // Predicated region
      $region49: #{block_type_b_nhwc.1} parent=47 // pred_check
        %p716 = pneg %p150
      $region50: #{block_type_b_nhwc.1} parent=47 // pred_check_branch
        %718 = sbr.rel (%p716) target = $region52
      $region51: #{block_type_b_nhwc.1} parent=47 // pred_region
        %p719 = scmp.lt.s32.totalorder %s17, 1
        %s720 = scalar_select %p719, %s17, 1
        %s721 = smul.addr %s720, 2
        %s722 = smul.addr %s721, 4
        %s723 = scalar_lea.vmem %s5, %s722
      $region52: #{block_type_b_nhwc.1} parent=47 // pred_fallthru
        _
    $region48: #{block_type_b_nhwc.1} parent=5 // pred_fallthru
      _
  $region6: #{block_type_b_nhwc.1} parent=0 // loop_footer
    %s15 = sadd.s32 1, %s11
  $region7: #{block_type_b_nhwc.1} parent=0 // loop_footer_branch
    %10 = sbr.rel target = $region3
  $region8: #{block_type_b_nhwc.1} parent=0 // loop_exit
    _

</llo_original>
